<compile_context>
chip_gen: v7x
topology: tpu7x:2x2x1
jax: 0.10.0
libtpu: 0.0.40
codegen_flags: <defaults>
</compile_context>

<pallas_src>
import functools

import jax
import jax.numpy as jnp
from jax.experimental import pallas as pl
from jax.experimental.pallas import tpu as pltpu


_TILE_BYTES_TARGET = 4 * 1024 * 1024   # ~4 MiB logits tile; x2 double-buffered ~8 MiB


def _gce_single_tile_kernel(logits_ref, targets_ref, loss_ref, *, q):
    """Whole class axis resident in VMEM: one-shot logsumexp, no scratch."""
    z = logits_ref[...].astype(jnp.float32)            # (block_n, C)
    t = targets_ref[...]                                # (block_n, 1) int32
    bn, bc = z.shape

    col = jax.lax.broadcasted_iota(jnp.int32, (bn, bc), 1)
    hit = col == t

    m = jnp.max(z, axis=1, keepdims=True)
    s = jnp.sum(jnp.exp(z - m), axis=1, keepdims=True)
    lse = m + jnp.log(s)
    z_t = jnp.sum(jnp.where(hit, z, 0.0), axis=1, keepdims=True)

    ce = lse - z_t                      # cross entropy per row
    w = jnp.exp(q * (z_t - lse))        # p_target ** q  (detached weight)
    loss_ref[...] = (ce * w).astype(loss_ref.dtype)


def _gce_online_kernel(logits_ref, targets_ref, loss_ref, m_ref, s_ref, zt_ref, *,
                       q, num_classes, block_c, needs_class_mask):
    """Class axis tiled: online logsumexp accumulated in per-row VMEM scratch."""
    k = pl.program_id(1)

    # Fresh accumulators at the start of every batch tile's class loop.
    @pl.when(k == 0)
    def _():
        m_ref[...] = jnp.full_like(m_ref, -jnp.inf)
        s_ref[...] = jnp.zeros_like(s_ref)
        zt_ref[...] = jnp.zeros_like(zt_ref)

    z = logits_ref[...].astype(jnp.float32)             # (block_n, block_c)
    t = targets_ref[...]                                 # (block_n, 1) int32
    bn, bc = z.shape

    # Global class index of each lane in this tile.
    col = jax.lax.broadcasted_iota(jnp.int32, (bn, bc), 1) + k * block_c
    if needs_class_mask:
        valid = col < num_classes
        z_lse = jnp.where(valid, z, -jnp.inf)
        hit = jnp.logical_and(valid, col == t)
    else:
        z_lse = z
        hit = col == t

    # Online logsumexp update.
    m_old = m_ref[...]
    m_new = jnp.maximum(m_old, jnp.max(z_lse, axis=1, keepdims=True))
    s_ref[...] = (s_ref[...] * jnp.exp(m_old - m_new)
                  + jnp.sum(jnp.exp(z_lse - m_new), axis=1, keepdims=True))
    m_ref[...] = m_new

    # Gather logit at the target class (where-select, no one-hot temporary).
    zt_ref[...] += jnp.sum(jnp.where(hit, z, 0.0), axis=1, keepdims=True)

    # Finalize on the last class tile.
    @pl.when(k == pl.num_programs(1) - 1)
    def _():
        lse = m_ref[...] + jnp.log(s_ref[...])
        z_t = zt_ref[...]
        ce = lse - z_t
        w = jnp.exp(q * (z_t - lse))
        loss_ref[...] = (ce * w).astype(loss_ref.dtype)


def _auto_blocks(n, c, itemsize):
    # Class tile: full C when it comfortably fits, else a 128-multiple chunk.
    block_c = c if c <= 8192 else 2048
    # Batch tile: aim for ~4 MiB of logits per tile, multiple of 8 rows.
    rows = _TILE_BYTES_TARGET // max(block_c * itemsize, 1)
    rows = max(8, (rows // 8) * 8)
    block_n = n if rows >= n else rows
    return block_n, block_c


def generalized_ce_loss(logits, targets, q=0.7, *, block_n=None, block_c=None,
                        vmem_limit_bytes=48 * 1024 * 1024):
    """logits: [N, C] float (kept in its HBM dtype), targets: [N] int -> [N] f32."""
    assert 0.0 < q < 1.0
    n, c = logits.shape
    itemsize = jnp.dtype(logits.dtype).itemsize

    auto_n, auto_c = _auto_blocks(n, c, itemsize)
    block_n = auto_n if block_n is None else min(block_n, n)
    block_c = auto_c if block_c is None else min(block_c, c)
    if block_n < n:
        assert block_n % 8 == 0, "batch tile must be a multiple of 8 (or full batch)"
    if block_c < c:
        assert block_c % 128 == 0, "class tile must be a multiple of 128 (or full C)"

    targets2d = targets.astype(jnp.int32).reshape(n, 1)
    grid_n = pl.cdiv(n, block_n)

    if block_c >= c:
        # Fast path: whole class axis in one tile; no scratch, no online LSE.
        kernel = functools.partial(_gce_single_tile_kernel, q=float(q))
        loss2d = pl.pallas_call(
            kernel,
            out_shape=jax.ShapeDtypeStruct((n, 1), jnp.float32),
            grid_spec=pltpu.PrefetchScalarGridSpec(
                num_scalar_prefetch=0,
                grid=(grid_n,),
                in_specs=[
                    pl.BlockSpec((block_n, c), lambda i: (i, 0)),
                    pl.BlockSpec((block_n, 1), lambda i: (i, 0)),
                ],
                out_specs=pl.BlockSpec((block_n, 1), lambda i: (i, 0)),
            ),
            compiler_params=pltpu.CompilerParams(
                dimension_semantics=("parallel",),
                vmem_limit_bytes=vmem_limit_bytes,
            ),
        )(logits, targets2d)
    else:
        kernel = functools.partial(
            _gce_online_kernel, q=float(q), num_classes=c, block_c=block_c,
            needs_class_mask=(c % block_c != 0))
        loss2d = pl.pallas_call(
            kernel,
            out_shape=jax.ShapeDtypeStruct((n, 1), jnp.float32),
            grid_spec=pltpu.PrefetchScalarGridSpec(
                num_scalar_prefetch=0,
                grid=(grid_n, pl.cdiv(c, block_c)),
                in_specs=[
                    pl.BlockSpec((block_n, block_c), lambda i, k: (i, k)),
                    pl.BlockSpec((block_n, 1), lambda i, k: (i, 0)),
                ],
                out_specs=pl.BlockSpec((block_n, 1), lambda i, k: (i, 0)),
                scratch_shapes=[
                    pltpu.VMEM((block_n, 1), jnp.float32),   # running max m
                    pltpu.VMEM((block_n, 1), jnp.float32),   # running sum s
                    pltpu.VMEM((block_n, 1), jnp.float32),   # logit at target class
                ],
            ),
            compiler_params=pltpu.CompilerParams(
                dimension_semantics=("parallel", "arbitrary"),
                vmem_limit_bytes=vmem_limit_bytes,
            ),
        )(logits, targets2d)
    return loss2d[:, 0]


def _reference(logits, targets, q=0.7):
    # pure-JAX reference mirroring the PyTorch module
    logits = logits.astype(jnp.float32)
    p = jax.nn.softmax(logits, axis=1)
    yg = jnp.take_along_axis(p, targets[:, None], axis=1)[:, 0]
    lse = jax.nn.logsumexp(logits, axis=1)
    z_t = jnp.take_along_axis(logits, targets[:, None], axis=1)[:, 0]
    return (lse - z_t) * (yg ** q)


if __name__ == "__main__":
    key = jax.random.PRNGKey(0)
    k1, k2, k3, k4, k5, k6, k7, k8 = jax.random.split(key, 8)

    # 1) Small default-config test (single-tile fast path).
    N1, C1 = 8, 16
    logits1 = jax.random.normal(k1, (N1, C1), dtype=jnp.float32)
    targets1 = jax.random.randint(k2, (N1,), 0, C1, dtype=jnp.int32)
    out1 = generalized_ce_loss(logits1, targets1, q=0.7)
    jax.block_until_ready(out1)
    ref1 = _reference(logits1, targets1, q=0.7)
    assert jnp.allclose(out1, ref1, atol=1e-5, rtol=1e-4), (out1, ref1)

    # 2) Multi-tile test: batch tiling + class tiling with online logsumexp.
    N2, C2 = 32, 256
    logits2 = jax.random.normal(k3, (N2, C2), dtype=jnp.float32)
    targets2 = jax.random.randint(k4, (N2,), 0, C2, dtype=jnp.int32)
    out2 = generalized_ce_loss(logits2, targets2, q=0.7, block_n=8, block_c=128)
    jax.block_until_ready(out2)
    ref2 = _reference(logits2, targets2, q=0.7)
    assert jnp.allclose(out2, ref2, atol=1e-5, rtol=1e-4), (out2, ref2)

    # 3) Ragged class axis (C not a multiple of block_c) -> exercises mask path.
    N3, C3 = 16, 160
    logits3 = jax.random.normal(k5, (N3, C3), dtype=jnp.float32)
    targets3 = jax.random.randint(k6, (N3,), 0, C3, dtype=jnp.int32)
    out3 = generalized_ce_loss(logits3, targets3, q=0.7, block_n=8, block_c=128)
    jax.block_until_ready(out3)
    ref3 = _reference(logits3, targets3, q=0.7)
    assert jnp.allclose(out3, ref3, atol=1e-5, rtol=1e-4), (out3, ref3)

    # 4) bf16 logits consumed in HBM dtype, upcast inside the kernel.
    N4, C4 = 16, 128
    logits4 = jax.random.normal(k7, (N4, C4), dtype=jnp.float32).astype(jnp.bfloat16)
    targets4 = jax.random.randint(k8, (N4,), 0, C4, dtype=jnp.int32)
    out4 = generalized_ce_loss(logits4, targets4, q=0.7)
    jax.block_until_ready(out4)
    ref4 = _reference(logits4.astype(jnp.float32), targets4, q=0.7)
    assert jnp.allclose(out4, ref4, atol=2e-2, rtol=2e-2), (out4, ref4)

    print("KERNEL_OK")
</pallas_src>

<mosaic_0001>
module attributes {stable_mosaic.version = 11 : i64} {
  func.func @_gce_single_tile_kernel(%arg0: i32, %arg1: memref<8x16xf32, #tpu.memory_space<vmem>>, %arg2: memref<8x1xi32, #tpu.memory_space<vmem>>, %arg3: memref<8x1xf32, #tpu.memory_space<vmem>>) attributes {dimension_semantics = [#tpu.dimension_semantics<parallel>], iteration_bounds = array<i64: 1>, scalar_prefetch = 0 : i64, scratch_operands = 0 : i64, tpu.core_type = #tpu.core_type<tc>, window_params = [{transform_indices = @transform_0, window_bounds = array<i64: 8, 16>}, {transform_indices = @transform_1, window_bounds = array<i64: 8, 1>}, {transform_indices = @transform_2, window_bounds = array<i64: 8, 1>}]} {
    %c0 = arith.constant 0 : index
    %c0_0 = arith.constant 0 : index
    %0 = vector.load %arg1[%c0, %c0_0] : memref<8x16xf32, #tpu.memory_space<vmem>>, vector<8x16xf32>
    %c0_1 = arith.constant 0 : index
    %c0_2 = arith.constant 0 : index
    %1 = vector.load %arg2[%c0_1, %c0_2] : memref<8x1xi32, #tpu.memory_space<vmem>>, vector<8x1xi32>
    %2 = tpu.iota {dimensions = array<i32: 1>} : vector<8x16xi32>
    %3 = vector.broadcast %1 : vector<8x1xi32> to vector<8x16xi32>
    %4 = arith.cmpi eq, %2, %3 : vector<8x16xi32>
    %cst = arith.constant dense<0xFF800000> : vector<8xf32>
    %5 = vector.multi_reduction <maximumf>, %0, %cst [1] : vector<8x16xf32> to vector<8xf32>
    %6 = vector.shape_cast %5 : vector<8xf32> to vector<8x1xf32>
    %7 = vector.broadcast %6 : vector<8x1xf32> to vector<8x16xf32>
    %8 = arith.subf %0, %7 : vector<8x16xf32>
    %9 = math.exp %8 : vector<8x16xf32>
    %cst_3 = arith.constant dense<0.000000e+00> : vector<8xf32>
    %10 = vector.multi_reduction <add>, %9, %cst_3 [1] : vector<8x16xf32> to vector<8xf32>
    %11 = vector.shape_cast %10 : vector<8xf32> to vector<8x1xf32>
    %12 = math.log %11 : vector<8x1xf32>
    %13 = arith.addf %6, %12 : vector<8x1xf32>
    %cst_4 = arith.constant 0.000000e+00 : f32
    %14 = vector.broadcast %cst_4 : f32 to vector<8x16xf32>
    %15 = arith.select %4, %0, %14 : vector<8x16xi1>, vector<8x16xf32>
    %cst_5 = arith.constant dense<0.000000e+00> : vector<8xf32>
    %16 = vector.multi_reduction <add>, %15, %cst_5 [1] : vector<8x16xf32> to vector<8xf32>
    %17 = vector.shape_cast %16 : vector<8xf32> to vector<8x1xf32>
    %18 = arith.subf %13, %17 : vector<8x1xf32>
    %19 = arith.subf %17, %13 : vector<8x1xf32>
    %cst_6 = arith.constant 0.699999988 : f32
    %20 = vector.broadcast %cst_6 : f32 to vector<8x1xf32>
    %21 = arith.mulf %20, %19 : vector<8x1xf32>
    %22 = math.exp %21 : vector<8x1xf32>
    %23 = arith.mulf %18, %22 : vector<8x1xf32>
    %c0_7 = arith.constant 0 : index
    %c0_8 = arith.constant 0 : index
    %24 = vector.load %arg3[%c0_7, %c0_8] : memref<8x1xf32, #tpu.memory_space<vmem>>, vector<8x1xf32>
    tpu.vector_store %arg3[%c0_7, %c0_8], %23 {strides = array<i32>} : memref<8x1xf32, #tpu.memory_space<vmem>>, vector<8x1xf32>,
    return
  }
  func.func @transform_0(%arg0: i32) -> (i32, i32) {
    %c0_i32 = arith.constant 0 : i32
    %c0_i32_0 = arith.constant 0 : i32
    return %arg0, %c0_i32 : i32, i32
  }
  func.func @transform_1(%arg0: i32) -> (i32, i32) {
    %c0_i32 = arith.constant 0 : i32
    %c0_i32_0 = arith.constant 0 : i32
    return %arg0, %c0_i32 : i32, i32
  }
  func.func @transform_2(%arg0: i32) -> (i32, i32) {
    %c0_i32 = arith.constant 0 : i32
    %c0_i32_0 = arith.constant 0 : i32
    return %arg0, %c0_i32 : i32, i32
  }
}

</mosaic_0001>

<llo_original>
// kernel: tpu_custom_call.1
$region0: #{tpu_custom_call.1}
  #allocation0 [shape = 'u32[]', space=smem, size = 0x4, offset = 0x4, fixed_abs, tag = 'smem constant byte address 0x4 - core index']
  #allocation1 [shape = 'u32[144,128]{1,0:T(1,128)}', space=vmem, size = 0x12000, scoped, tag = 'internal scratch']
  %s0 = inlined_call_operand.vmem [shape: f32[8,16], index: 0, kind: input, shape index: {}]
  %s1 = inlined_call_operand.vmem [shape: s32[8,1], index: 1, kind: input, shape index: {}]
  %s2 = inlined_call_operand.vmem [shape: f32[8,1], index: 2, kind: output, shape index: {}]
  %s3 = sld [smem:[#allocation0]]
  $region18: #{tpu_custom_call.1} parent=0
    _
  %s5 = ssub.s32 1, %s3
  %s6 = scalar_select 0, %s5, %s3
  // Predicated region
  $region2: #{tpu_custom_call.1} parent=0 // pred_check
    _
  $region3: #{tpu_custom_call.1} parent=0 // pred_check_branch
    %8 = sbr.rel (0) target = $region5
  $region4: #{tpu_custom_call.1} parent=0 // pred_region
    _
  $region5: #{tpu_custom_call.1} parent=0 // pred_fallthru
    _
  // Predicated region
  $region6: #{tpu_custom_call.1} parent=0 // pred_check
    _
  $region7: #{tpu_custom_call.1} parent=0 // pred_check_branch
    %10 = sbr.rel (0) target = $region9
  $region8: #{tpu_custom_call.1} parent=0 // pred_region
    _
  $region9: #{tpu_custom_call.1} parent=0 // pred_fallthru
    _
  %v11 = vld [vmem:[%s0] sm:$0xff]
  %v12 = vld [vmem:[%s1] sm:$0xff]
  %v13 = vlaneseq
  %v14 = vand.u32 %v13, 127
  %15 = vset.pattern.permute.xlu0 0
  %16 = vperm.xlu0 %15, %v12
  %v17 = vpop.permute.xlu0 %16
  %vm18 = vcmp.eq.s32.totalorder %v14, %v17
  %vm19 = vcmask 130048
  %v20 = vsel %vm19, %v11, -inf
  %21 = vmax.xlane.f32.xlu0 %v20
  %v22 = vpop.xlane.xlu0 %21
  %v23 = vsub.f32 %v11, %v22
  %v24 = vmul.f32 %v23, 1.442695
  %v25 = vpow.pop %v24
  %v26 = vsel %vm19, %v25, 0.0
  %27 = vadd.xlane.f32.xlu0 %v26
  %v28 = vpop.xlane.xlu0 %27
  %v29 = vlog2.pop %v28
  %v30 = vmul.f32 %v29, 0.6931472
  %v31 = vadd.f32 %v22, %v30
  %v32 = vsel %vm18, %v11, 0.0
  %v33 = vsel %vm19, %v32, 0.0
  %34 = vadd.xlane.f32.xlu0 %v33
  %v35 = vpop.xlane.xlu0 %34
  %v36 = vsub.f32 %v31, %v35
  %v37 = vsub.f32 %v35, %v31
  %v38 = vmul.f32 %v37, 0.7
  %v39 = vmul.f32 %v38, 1.442695
  %v40 = vpow.pop %v39
  %v41 = vmul.f32 %v36, %v40
  %vm42 = vcmask 7168
  %43 = vst.msk [vmem:[%s2] sm:$0xff] %vm42, %v41
  // Predicated region
  $region10: #{tpu_custom_call.1} parent=0 // pred_check
    _
  $region11: #{tpu_custom_call.1} parent=0 // pred_check_branch
    %45 = sbr.rel (0) target = $region13
  $region12: #{tpu_custom_call.1} parent=0 // pred_region
    _
  $region13: #{tpu_custom_call.1} parent=0 // pred_fallthru
    _
  // Predicated region
  $region14: #{tpu_custom_call.1} parent=0 // pred_check
    _
  $region15: #{tpu_custom_call.1} parent=0 // pred_check_branch
    %47 = sbr.rel (0) target = $region17
  $region16: #{tpu_custom_call.1} parent=0 // pred_region
    _
  $region17: #{tpu_custom_call.1} parent=0 // pred_fallthru
    _

</llo_original>
